<compile_context>
chip_gen: v5e
topology: v5e:2x2
jax: 0.10.0
libtpu: 0.0.40
codegen_flags: <defaults>
</compile_context>

<pallas_src>
import jax
import jax.numpy as jnp
from jax import lax
from jax.experimental import pallas as pl
from jax.experimental.pallas import tpu as pltpu

_LANE = 128
_MIB = 1024 * 1024


def _round_up(x, m):
    return ((x + m - 1) // m) * m


def _physical_vmem_bytes():
    """Best-effort physical VMEM query; conservative fallback (v7x per-TC)."""
    try:
        return int(pltpu.get_tpu_info().vmem_capacity_bytes)
    except Exception:
        return 64 * _MIB


def _choose_tiles(m, k, use_bf16, phys):
    """Pick (m_pad, k_pad, tk, elt_bytes).

    m is padded only to the dtype sublane multiple; k only to the next 128
    multiple, with tk a divisor of k_pad so no extra zero columns are ever
    DMA'd or multiplied.  tk is the largest such divisor that keeps the
    double-buffered feature slabs plus the two gram-sized residents inside
    ~70% of physical VMEM.
    """
    sub = 16 if use_bf16 else 8
    elt = 2 if use_bf16 else 4
    m_pad = _round_up(max(m, sub), sub)
    k_pad = _round_up(max(k, _LANE), _LANE)
    n_units = k_pad // _LANE

    fixed = 2 * m_pad * m_pad * 4            # gram accumulator + target/output
    budget = (phys * 7) // 10
    avail = max(budget - fixed, 2 * m_pad * _LANE * elt)
    cap_units = max(1, avail // (2 * m_pad * elt * _LANE))   # 2x: double buffer
    cap_units = min(cap_units, n_units)

    tk_units = 1
    for d in range(1, cap_units + 1):        # largest divisor of n_units <= cap
        if n_units % d == 0:
            tk_units = d
    tk = tk_units * _LANE                    # 256-aligned whenever n_units even
    return m_pad, k_pad, tk, elt


def _prepare(x, use_bf16):
    """Reshape NCHW -> (M, K); cast, then zero-pad only if actually needed."""
    a, b, c, d = x.shape
    m, k = a * b, c * d
    denom = float(a * b * c * d)
    phys = _physical_vmem_bytes()
    m_pad, k_pad, tk, elt = _choose_tiles(m, k, use_bf16, phys)
    feats = x.reshape(m, k).astype(jnp.bfloat16 if use_bf16 else jnp.float32)
    if (m_pad, k_pad) != (m, k):
        # Cast-before-pad keeps the pad's HBM round trip at the narrow dtype;
        # skipped entirely when the features are already tile-aligned.
        feats = jnp.pad(feats, ((0, m_pad - m), (0, k_pad - k)))
    return feats, m, m_pad, k_pad, tk, elt, phys, denom


def _compiler_params(m_pad, tk, elt, phys):
    resident = 2 * m_pad * tk * elt + 2 * m_pad * m_pad * 4
    vmem_limit = int(min(phys * 4 // 5,              # >=20% Mosaic headroom
                         max(32 * _MIB, resident + 4 * _MIB)))
    return pltpu.CompilerParams(
        dimension_semantics=("arbitrary",),          # K axis is a reduction
        vmem_limit_bytes=vmem_limit,
    )


# ---------------------------------------------------------------------------
# Kernels
# ---------------------------------------------------------------------------

def _gram_kernel(scale_ref, feat_ref, g_ref):
    # scale_ref: SMEM (1,)  [1/denom]
    # feat_ref : VMEM (M_pad, tk) feature slab for this K-tile
    # g_ref    : VMEM (M_pad, M_pad) f32 output gram, resident across the grid
    k = pl.program_id(0)

    @pl.when(k == 0)
    def _():
        g_ref[...] = jnp.zeros_like(g_ref)

    f = feat_ref[...]
    # F_tile @ F_tile^T via dot_general contracting both K axes — no
    # transpose is materialized; accumulate directly into the output block.
    g_ref[...] += lax.dot_general(
        f, f,
        dimension_numbers=(((1,), (1,)), ((), ())),
        preferred_element_type=jnp.float32,
    )

    @pl.when(k == pl.num_programs(0) - 1)
    def _():
        g_ref[...] = g_ref[...] * scale_ref[0]


def _loss_kernel(scale_ref, feat_ref, target_hbm, loss_ref,
                 acc_ref, tgt_ref, tgt_sem):
    # scale_ref : SMEM (2,)  [1/denom, 1/(M_orig^2)]
    # feat_ref  : VMEM (M_pad, tk) feature slab
    # target_hbm: HBM  (M_pad, M_pad) precomputed padded target gram (ANY)
    # loss_ref  : SMEM (1,) scalar MSE output
    # acc_ref   : VMEM (M_pad, M_pad) f32 gram accumulator
    # tgt_ref   : VMEM (M_pad, M_pad) target landing buffer (single copy)
    # tgt_sem   : DMA semaphore
    k = pl.program_id(0)

    @pl.when(k == 0)
    def _():
        acc_ref[...] = jnp.zeros_like(acc_ref)
        loss_ref[0] = 0.0
        # Prefetch the target gram now; it is only needed in the epilogue,
        # so the DMA overlaps the entire K reduction.
        pltpu.make_async_copy(target_hbm, tgt_ref, tgt_sem).start()

    f = feat_ref[...]
    acc_ref[...] += lax.dot_general(
        f, f,
        dimension_numbers=(((1,), (1,)), ((), ())),
        preferred_element_type=jnp.float32,
    )

    @pl.when(k == pl.num_programs(0) - 1)
    def _():
        pltpu.make_async_copy(target_hbm, tgt_ref, tgt_sem).wait()
        g = acc_ref[...] * scale_ref[0]
        diff = g - tgt_ref[...]
        # Padded rows/cols are zero in both grams -> contribute nothing.
        loss_ref[0] = jnp.sum(diff * diff) * scale_ref[1]


# ---------------------------------------------------------------------------
# Wrappers
# ---------------------------------------------------------------------------

def _gram_padded(feats_pad, m_pad, tk, elt, phys, denom):
    """Padded (M_pad, M_pad) gram matrix of a padded feature matrix."""
    k_pad = feats_pad.shape[1]
    nk = k_pad // tk
    scale = jnp.array([1.0 / denom], dtype=jnp.float32)
    return pl.pallas_call(
        _gram_kernel,
        out_shape=jax.ShapeDtypeStruct((m_pad, m_pad), jnp.float32),
        grid=(nk,),
        in_specs=[
            pl.BlockSpec(memory_space=pltpu.MemorySpace.SMEM),
            pl.BlockSpec((m_pad, tk), lambda kk: (0, kk)),
        ],
        out_specs=pl.BlockSpec((m_pad, m_pad), lambda kk: (0, 0)),
        compiler_params=_compiler_params(m_pad, tk, elt, phys),
        cost_estimate=pl.CostEstimate(
            flops=2 * m_pad * m_pad * k_pad,
            transcendentals=0,
            bytes_accessed=m_pad * k_pad * elt + m_pad * m_pad * 4,
        ),
    )(scale, feats_pad)


def _gram_mse_padded(feats_pad, target_pad, m_pad, tk, elt, phys, denom, m_orig):
    """Loss-only path: scalar MSE, no gram writeback to HBM."""
    k_pad = feats_pad.shape[1]
    nk = k_pad // tk
    scale = jnp.array([1.0 / denom, 1.0 / float(m_orig * m_orig)],
                      dtype=jnp.float32)
    loss = pl.pallas_call(
        _loss_kernel,
        out_shape=jax.ShapeDtypeStruct((1,), jnp.float32),
        grid=(nk,),
        in_specs=[
            pl.BlockSpec(memory_space=pltpu.MemorySpace.SMEM),
            pl.BlockSpec((m_pad, tk), lambda kk: (0, kk)),
            pl.BlockSpec(memory_space=pl.ANY),     # target gram stays in HBM
        ],
        out_specs=pl.BlockSpec(memory_space=pltpu.MemorySpace.SMEM),
        scratch_shapes=[
            pltpu.VMEM((m_pad, m_pad), jnp.float32),   # gram accumulator
            pltpu.VMEM((m_pad, m_pad), jnp.float32),   # target landing buffer
            pltpu.SemaphoreType.DMA,
        ],
        compiler_params=_compiler_params(m_pad, tk, elt, phys),
        cost_estimate=pl.CostEstimate(
            flops=2 * m_pad * m_pad * k_pad + 3 * m_pad * m_pad,
            transcendentals=0,
            bytes_accessed=m_pad * k_pad * elt + m_pad * m_pad * 4 + 4,
        ),
    )(scale, feats_pad, target_pad)
    return loss[0]


def gram_matrix(x, use_bf16=False):
    """gram_matrix semantics from the PyTorch reference (unpadded result)."""
    feats, m, m_pad, _k_pad, tk, elt, phys, denom = _prepare(x, use_bf16)
    g_pad = _gram_padded(feats, m_pad, tk, elt, phys, denom)
    return g_pad[:m, :m]


class StyleLoss:
    """JAX/Pallas port of the PyTorch StyleLoss module."""

    def __init__(self, target_feature, use_bf16=False):
        self.use_bf16 = use_bf16
        feats, m, m_pad, _k_pad, tk, elt, phys, denom = _prepare(
            target_feature, use_bf16)
        self._m = m
        self._m_pad = m_pad
        # Target gram is fixed ("detached") at init; keep the padded version
        # (zero pad region) so the loss kernel can DMA it straight from HBM.
        self._target_padded = lax.stop_gradient(
            _gram_padded(feats, m_pad, tk, elt, phys, denom))
        self.target = self._target_padded[:m, :m]
        self.loss = None

    def forward(self, x):
        feats, m, m_pad, _k_pad, tk, elt, phys, denom = _prepare(
            x, self.use_bf16)
        assert m == self._m, (
            f"input a*b={m} does not match target a*b={self._m}")
        assert m_pad == self._m_pad
        self.loss = _gram_mse_padded(
            feats, self._target_padded, m_pad, tk, elt, phys, denom, m)
        # Same as the PyTorch module: forward returns its input unchanged.
        return x

    __call__ = forward


if __name__ == "__main__":
    key = jax.random.PRNGKey(0)
    k_target, k_input = jax.random.split(key)

    # Small shapes consistent with gram_matrix's (a, b, c, d) convention.
    a, b, c, d = 2, 4, 16, 16
    target_feature = jax.random.normal(k_target, (a, b, c, d), dtype=jnp.float32)
    x = jax.random.normal(k_input, (a, b, c, d), dtype=jnp.float32)

    module = StyleLoss(target_feature)
    out = module(x)

    out = jax.block_until_ready(out)
    loss = jax.block_until_ready(module.loss)
    g_kernel = jax.block_until_ready(gram_matrix(x))

    # Plain-JAX reference.
    def ref_gram(t):
        aa, bb, cc, dd = t.shape
        f = t.reshape(aa * bb, cc * dd).astype(jnp.float32)
        return (f @ f.T) / (aa * bb * cc * dd)

    ref_loss = jnp.mean((ref_gram(x) - ref_gram(target_feature)) ** 2)

    assert out.shape == x.shape
    assert bool(jnp.allclose(out, x))
    assert bool(jnp.allclose(g_kernel, ref_gram(x), rtol=1e-5, atol=1e-6))
    assert bool(jnp.allclose(module.target, ref_gram(target_feature),
                             rtol=1e-5, atol=1e-6))
    assert bool(jnp.allclose(loss, ref_loss, rtol=1e-5, atol=1e-6))

    # bf16 production path (bf16 slabs, f32 MXU accumulation): smoke test
    # with a loose tolerance — exercises the packed-sublane tiling.
    module_bf16 = StyleLoss(target_feature, use_bf16=True)
    module_bf16(x)
    loss_bf16 = jax.block_until_ready(module_bf16.loss)
    assert bool(jnp.isfinite(loss_bf16))
    assert abs(float(loss_bf16) - float(ref_loss)) <= 0.25 * float(ref_loss) + 1e-6

    print("KERNEL_OK")
</pallas_src>

<mosaic_0001>
module attributes {stable_mosaic.version = 11 : i64} {
  func.func @_gram_kernel(%arg0: i32, %arg1: memref<1xf32, #tpu.memory_space<smem>>, %arg2: memref<8x256xf32, #tpu.memory_space<vmem>>, %arg3: memref<8x8xf32, #tpu.memory_space<vmem>>) attributes {dimension_semantics = [#tpu.dimension_semantics<arbitrary>], iteration_bounds = array<i64: 1>, scalar_prefetch = 0 : i64, scratch_operands = 0 : i64, tpu.core_type = #tpu.core_type<tc>, window_params = [{transform_indices = @transform_0, window_bounds = array<i64: 1>}, {transform_indices = @transform_1, window_bounds = array<i64: 8, 256>}, {pipeline_mode = #tpu.pipeline_mode<synchronous>, transform_indices = @transform_2, window_bounds = array<i64: 8, 8>}]} {
    %c0_i32 = arith.constant 0 : i32
    %0 = arith.cmpi eq, %arg0, %c0_i32 : i32
    %1 = arith.extui %0 : i1 to i32
    %c0_i32_0 = arith.constant 0 : i32
    %2 = arith.cmpi ne, %1, %c0_i32_0 : i32
    scf.if %2 {
      %cst_8 = arith.constant 0.000000e+00 : f32
      %11 = vector.broadcast %cst_8 : f32 to vector<8x8xf32>
      %c0_9 = arith.constant 0 : index
      %c0_10 = arith.constant 0 : index
      %12 = vector.load %arg3[%c0_9, %c0_10] : memref<8x8xf32, #tpu.memory_space<vmem>>, vector<8x8xf32>
      tpu.vector_store %arg3[%c0_9, %c0_10], %11 {strides = array<i32>} : memref<8x8xf32, #tpu.memory_space<vmem>>, vector<8x8xf32>,
    } else {
    }
    %c0 = arith.constant 0 : index
    %c0_1 = arith.constant 0 : index
    %3 = vector.load %arg2[%c0, %c0_1] : memref<8x256xf32, #tpu.memory_space<vmem>>, vector<8x256xf32>
    %c0_2 = arith.constant 0 : index
    %c0_3 = arith.constant 0 : index
    %4 = vector.load %arg3[%c0_2, %c0_3] : memref<8x8xf32, #tpu.memory_space<vmem>>, vector<8x8xf32>
    %cst = arith.constant dense<0.000000e+00> : vector<8x8xf32>
    %5 = tpu.matmul %3, %3, %cst {dimension_numbers = #tpu.dot_dimension_numbers<[1], [1], [0], [0], [0, 0, 1, 0], [], []>} : vector<8x256xf32>, vector<8x256xf32>, vector<8x8xf32> -> vector<8x8xf32>
    %6 = arith.addf %4, %5 : vector<8x8xf32>
    %c0_4 = arith.constant 0 : index
    %c0_5 = arith.constant 0 : index
    %7 = vector.load %arg3[%c0_4, %c0_5] : memref<8x8xf32, #tpu.memory_space<vmem>>, vector<8x8xf32>
    tpu.vector_store %arg3[%c0_4, %c0_5], %6 {strides = array<i32>} : memref<8x8xf32, #tpu.memory_space<vmem>>, vector<8x8xf32>,
    %c0_i32_6 = arith.constant 0 : i32
    %8 = arith.cmpi eq, %arg0, %c0_i32_6 : i32
    %9 = arith.extui %8 : i1 to i32
    %c0_i32_7 = arith.constant 0 : i32
    %10 = arith.cmpi ne, %9, %c0_i32_7 : i32
    scf.if %10 {
      %c0_8 = arith.constant 0 : index
      %c0_9 = arith.constant 0 : index
      %11 = vector.load %arg3[%c0_8, %c0_9] : memref<8x8xf32, #tpu.memory_space<vmem>>, vector<8x8xf32>
      %c0_10 = arith.constant 0 : index
      %12 = memref.load %arg1[%c0_10] : memref<1xf32, #tpu.memory_space<smem>>
      %13 = vector.broadcast %12 : f32 to vector<8x8xf32>
      %14 = arith.mulf %11, %13 : vector<8x8xf32>
      %c0_11 = arith.constant 0 : index
      %c0_12 = arith.constant 0 : index
      %15 = vector.load %arg3[%c0_11, %c0_12] : memref<8x8xf32, #tpu.memory_space<vmem>>, vector<8x8xf32>
      tpu.vector_store %arg3[%c0_11, %c0_12], %14 {strides = array<i32>} : memref<8x8xf32, #tpu.memory_space<vmem>>, vector<8x8xf32>,
    } else {
    }
    return
  }
  func.func @transform_0(%arg0: i32) -> i32 {
    %c0_i32 = arith.constant 0 : i32
    %c0_i32_0 = arith.constant 0 : i32
    return %c0_i32 : i32
  }
  func.func @transform_1(%arg0: i32) -> (i32, i32) {
    %c0_i32 = arith.constant 0 : i32
    %c0_i32_0 = arith.constant 0 : i32
    return %c0_i32, %arg0 : i32, i32
  }
  func.func @transform_2(%arg0: i32) -> (i32, i32) {
    %c0_i32 = arith.constant 0 : i32
    %c0_i32_0 = arith.constant 0 : i32
    %c0_i32_1 = arith.constant 0 : i32
    return %c0_i32, %c0_i32_0 : i32, i32
  }
}

</mosaic_0001>

<llo_original>
// kernel: tpu_custom_call.1
$region0: #{tpu_custom_call.1}
  #allocation0 [shape = 'u32[]', space=smem, size = 0x4, offset = 0x4, fixed_abs, tag = 'smem constant byte address 0x4 - core index']
  #allocation1 [shape = 'u32[72,128]{1,0:T(1,128)}', space=vmem, size = 0x9000, scoped, tag = 'internal scratch']
  #allocation2 [shape = 'f32[1]{0:T(128)S(6)}', space=smem, size = 0x200, scoped, tag = 'scoped memory for tpu_custom_call.1']
  %s0 = inlined_call_operand.<no memory space> [shape: f32[1], index: 0, kind: input, shape index: {}]
  %s1 = inlined_call_operand.hbm [shape: f32[8,256], index: 1, kind: input, shape index: {}]
  %s2 = inlined_call_operand.hbm [shape: f32[8,8], index: 2, kind: output, shape index: {}]
  %s3 = sld [smem:[#allocation0]]
  $region30: #{tpu_custom_call.1} parent=0
    _
  %s5 = ssub.s32 1, %s3
  %s6 = scalar_select 0, %s5, %s3
  %7 = sst [smem:[#allocation2]] %s0
  $region1: #{tpu_custom_call.1} parent=0
    #allocation3 [shape = 'u8[8192]{0}', space=vmem, size = 0x2000, scoped, tag = 'input window, operand 1, single buffered']
    #allocation4 [shape = 's32[1]{0}', space=sflag, size = 0x4, scoped, tag = 'scoped memory for tpu_custom_call.1']
    #allocation5 [shape = 's32[1]{0}', space=sflag, size = 0x4, scoped, tag = 'scoped memory for tpu_custom_call.1']
    #allocation6 [shape = 'u8[4096]{0}', space=vmem, size = 0x1000, scoped, tag = 'output window, operand 0, single buffered']
    %8 = vsyncpa [#allocation4], 0
    %9 = vsyncpa [#allocation5], 0
    // Predicated region
    $region2: #{tpu_custom_call.1} parent=1 // pred_check
      _
    $region3: #{tpu_custom_call.1} parent=1 // pred_check_branch
      %11 = sbr.rel (0) target = $region5
    $region4: #{tpu_custom_call.1} parent=1 // pred_region
      _
    $region5: #{tpu_custom_call.1} parent=1 // pred_fallthru
      _
    // Predicated region
    $region6: #{tpu_custom_call.1} parent=1 // pred_check
      _
    $region7: #{tpu_custom_call.1} parent=1 // pred_check_branch
      %13 = sbr.rel (0) target = $region9
    $region8: #{tpu_custom_call.1} parent=1 // pred_region
      %15 = vsyncadd [#allocation4], 0
      %s17 = sshll.u32 %s1, 4
      %s18 = int_to_ptr.hbm [resolvable:$true] %s17
      %s19 = sshll.u32 [#allocation3], 4
      %s20 = int_to_ptr.vmem [resolvable:$true] %s19
      %22 = dma.hbm_to_vmem [thread:$0]  %s18, 256, %s20, [#allocation4]
    $region9: #{tpu_custom_call.1} parent=1 // pred_fallthru
      _
    // Predicated region
    $region10: #{tpu_custom_call.1} parent=1 // pred_check
      _
    $region11: #{tpu_custom_call.1} parent=1 // pred_check_branch
      %24 = sbr.rel (0) target = $region13
    $region12: #{tpu_custom_call.1} parent=1 // pred_region
      %26 = dma.done [#allocation4], 256
    $region13: #{tpu_custom_call.1} parent=1 // pred_fallthru
      _
    %p27 = scmp.eq.s32.totalorder 0, 0
    // Predicated region
    $region14: #{tpu_custom_call.1} parent=1 // pred_check
      %p28 = pneg %p27
    $region15: #{tpu_custom_call.1} parent=1 // pred_check_branch
      %30 = sbr.rel (%p28) target = $region17
    $region16: #{tpu_custom_call.1} parent=1 // pred_region
      %vm31 = vcmask 64512
      %32 = vst.msk [vmem:[#allocation6] sm:$0xff] %vm31, 0.0
    $region17: #{tpu_custom_call.1} parent=1 // pred_fallthru
      _
    %v33 = vld [vmem:[#allocation3] sm:$0xff]
    %v34 = vld [vmem:[#allocation3 + $0x8] sm:$0xff]
    %v35 = vld [vmem:[#allocation6] sm:$0xff]
    %36 = vmatpush.xpose.msra.mxu0 0.0
    %37 = vmatpush.xpose.msra.mxu0 0.0
    %38 = vmatpush.xpose.msra.mxu0 0.0
    %39 = vmatpush.xpose.msra.mxu0 0.0
    %40 = vmatpush.xpose.msra.mxu0 0.0
    %41 = vmatpush.xpose.msra.mxu0 0.0
    %42 = vmatpush.xpose.msra.mxu0 0.0
    %43 = vmatpush.xpose.msra.mxu0 0.0
    %44 = vmatpush.xpose.msra.mxu0 0.0
    %45 = vmatpush.xpose.msra.mxu0 0.0
    %46 = vmatpush.xpose.msra.mxu0 0.0
    %47 = vmatpush.xpose.msra.mxu0 0.0
    %48 = vmatpush.xpose.msra.mxu0 0.0
    %49 = vmatpush.xpose.msra.mxu0 0.0
    %50 = vmatpush.xpose.msra.mxu0 0.0
    %51 = vmatpush.xpose.msra.mxu0 %v33
    %52 = vmatmul.f32.gmra.mxu0 %v33
    %v53 = vpop.f32.mrf.mxu0
    %v54 = vadd.f32 0.0, %v53
    %55 = vdwg.mxu0
    %56 = vmatpush.xpose.msra.mxu0 0.0
    %57 = vmatpush.xpose.msra.mxu0 0.0
    %58 = vmatpush.xpose.msra.mxu0 0.0
    %59 = vmatpush.xpose.msra.mxu0 0.0
    %60 = vmatpush.xpose.msra.mxu0 0.0
    %61 = vmatpush.xpose.msra.mxu0 0.0
    %62 = vmatpush.xpose.msra.mxu0 0.0
    %63 = vmatpush.xpose.msra.mxu0 0.0
    %64 = vmatpush.xpose.msra.mxu0 0.0
    %65 = vmatpush.xpose.msra.mxu0 0.0
    %66 = vmatpush.xpose.msra.mxu0 0.0
    %67 = vmatpush.xpose.msra.mxu0 0.0
    %68 = vmatpush.xpose.msra.mxu0 0.0
    %69 = vmatpush.xpose.msra.mxu0 0.0
    %70 = vmatpush.xpose.msra.mxu0 0.0
    %71 = vmatpush.xpose.msra.mxu0 %v34
    %72 = vmatmul.f32.gmra.mxu0 %v34
    %v73 = vpop.f32.mrf.mxu0
    %v74 = vadd.f32 %v54, %v73
    %75 = vdwg.mxu0
    %v76 = vadd.f32 %v35, %v74
    %vm77 = vcmask 64512
    %78 = vst.msk [vmem:[#allocation6] sm:$0xff] %vm77, %v76
    // Predicated region
    $region18: #{tpu_custom_call.1} parent=1 // pred_check
      %p79 = pneg %p27
    $region19: #{tpu_custom_call.1} parent=1 // pred_check_branch
      %81 = sbr.rel (%p79) target = $region21
    $region20: #{tpu_custom_call.1} parent=1 // pred_region
      %v82 = vld [vmem:[#allocation6] sm:$0xff]
      %s83 = sld [smem:[#allocation2]]
      %v84 = vstv %s83
      %v85 = vmul.f32 %v82, %v84
      %86 = vst.msk [vmem:[#allocation6] sm:$0xff] %vm77, %v85
    $region21: #{tpu_custom_call.1} parent=1 // pred_fallthru
      _
    // Predicated region
    $region22: #{tpu_custom_call.1} parent=1 // pred_check
      _
    $region23: #{tpu_custom_call.1} parent=1 // pred_check_branch
      %88 = sbr.rel (0) target = $region25
    $region24: #{tpu_custom_call.1} parent=1 // pred_region
      %90 = vsyncadd [#allocation5], 0
      %s92 = sshll.u32 [#allocation6], 4
      %s93 = int_to_ptr.vmem [resolvable:$true] %s92
      %s94 = sshll.u32 %s2, 4
      %s95 = int_to_ptr.hbm [resolvable:$true] %s94
      %97 = dma.vmem_to_hbm [thread:$0]  %s93, 128, %s95, [#allocation5]
    $region25: #{tpu_custom_call.1} parent=1 // pred_fallthru
      _
    // Predicated region
    $region26: #{tpu_custom_call.1} parent=1 // pred_check
      _
    $region27: #{tpu_custom_call.1} parent=1 // pred_check_branch
      %99 = sbr.rel (0) target = $region29
    $region28: #{tpu_custom_call.1} parent=1 // pred_region
      %101 = dma.done [#allocation5], 128
    $region29: #{tpu_custom_call.1} parent=1 // pred_fallthru
      _
    %102 = vsyncpa [#allocation4], 1
    %103 = vsyncpa [#allocation5], 1

</llo_original>
